<compile_context>
chip_gen: v7x
topology: tpu7x:2x2x1
jax: 0.10.0
libtpu: 0.0.40
codegen_flags: <defaults>
</compile_context>

<pallas_src>
import functools

import jax
import jax.numpy as jnp
from jax import lax
from jax.experimental import pallas as pl
from jax.experimental.pallas import tpu as pltpu

block_size = 256
n_embed = 384


# ----------------------------------------------------------------------------
# Fused kernel: one batch element per program.
#   x_ref:    (T, C)        input activations
#   wqkv_ref: (C, 3*hs)     [Wq*scale | Wk | Wv] stacked along the output dim
#   mask_ref: (T, T)        additive causal mask (0 on/below diag, -1e30 above)
#   o_ref:    (T, hs)       attention output for this batch element
# ----------------------------------------------------------------------------
def _head_kernel(x_ref, wqkv_ref, mask_ref, o_ref, *, head_size):
    x = x_ref[...].astype(jnp.bfloat16)          # (T, C)
    w = wqkv_ref[...].astype(jnp.bfloat16)       # (C, 3*hs)

    # Single fused QKV projection on the MXU, f32 accumulation.
    qkv = jnp.dot(x, w, preferred_element_type=jnp.float32)          # (T, 3*hs)

    hs = head_size
    q = qkv[:, 0 * hs:1 * hs].astype(jnp.bfloat16)   # scale already folded into Wq
    k = qkv[:, 1 * hs:2 * hs].astype(jnp.bfloat16)
    v = qkv[:, 2 * hs:3 * hs].astype(jnp.bfloat16)

    # Scores: contract the last dims of q and k directly (no explicit transpose).
    s = lax.dot_general(
        q, k,
        dimension_numbers=(((1,), (1,)), ((), ())),
        preferred_element_type=jnp.float32,
    )                                                                 # (T, T) f32
    s = s + mask_ref[...]                                             # causal mask (additive)

    # Numerically stable softmax in f32; diagonal is always unmasked so the
    # row max is finite and no NaN can appear.
    m = jnp.max(s, axis=-1, keepdims=True)
    p = jnp.exp(s - m)
    denom = jnp.sum(p, axis=-1, keepdims=True)
    p = p * pl.reciprocal(denom, approx=True)                         # EUP divide

    out = jnp.dot(p.astype(jnp.bfloat16), v,
                  preferred_element_type=jnp.float32)                 # (T, hs)
    o_ref[...] = out.astype(o_ref.dtype)


def head_attention(x, wq, wk, wv):
    """Single-head causal self-attention.

    x:  (B, T, C) with C == n_embed
    wq/wk/wv: (C, head_size)  (transpose of torch nn.Linear weight)
    returns: (B, T, head_size)
    """
    B, T, C = x.shape
    assert C == n_embed
    assert T <= block_size
    hs = wq.shape[-1]
    assert wq.shape == wk.shape == wv.shape == (C, hs)
    scale = float(hs) ** -0.5

    # Stack QKV weights into one (C, 3*hs) matrix -> one wide matmul in-kernel.
    # The attention scale is folded into the Wq columns (applied once, in f32).
    w_qkv = jnp.concatenate([wq * scale, wk, wv], axis=-1)            # (C, 3*hs)

    # Additive causal mask (grid-invariant input; same block for every program,
    # so it is DMA'd once and stays resident in VMEM).
    row = lax.broadcasted_iota(jnp.int32, (T, T), 0)
    col = lax.broadcasted_iota(jnp.int32, (T, T), 1)
    mask = jnp.where(col <= row, 0.0, -1e30).astype(jnp.float32)      # (T, T)

    return pl.pallas_call(
        functools.partial(_head_kernel, head_size=hs),
        out_shape=jax.ShapeDtypeStruct((B, T, hs), x.dtype),
        grid_spec=pltpu.PrefetchScalarGridSpec(
            num_scalar_prefetch=0,
            grid=(B,),
            in_specs=[
                pl.BlockSpec((pl.Squeezed(), T, C), lambda b: (b, 0, 0)),
                pl.BlockSpec((C, 3 * hs), lambda b: (0, 0)),
                pl.BlockSpec((T, T), lambda b: (0, 0)),
            ],
            out_specs=pl.BlockSpec((pl.Squeezed(), T, hs), lambda b: (b, 0, 0)),
        ),
        compiler_params=pltpu.CompilerParams(
            dimension_semantics=("parallel",)),   # batch axis shards across TCs
    )(x, w_qkv, mask)


# ----------------------------------------------------------------------------
# Pure-JAX reference (f32, mirrors the PyTorch forward in eval mode).
# ----------------------------------------------------------------------------
def reference(x, wq, wk, wv):
    B, T, C = x.shape
    hs = wq.shape[-1]
    q = x @ wq
    k = x @ wk
    v = x @ wv
    w = (q @ jnp.swapaxes(k, -2, -1)) * (hs ** -0.5)
    tril = jnp.tril(jnp.ones((T, T), dtype=bool))
    w = jnp.where(tril, w, -jnp.inf)
    w = jax.nn.softmax(w, axis=-1)
    return w @ v


if __name__ == "__main__":
    # Small shapes consistent with the module: C = n_embed = 384 (fixed by the
    # module), head_size = 64 (nanoGPT-style), B = 2, T = 16 <= block_size.
    B, T = 2, 16
    head_size = 64

    key = jax.random.PRNGKey(0)
    kx, kq, kk, kv = jax.random.split(key, 4)

    x = jax.random.normal(kx, (B, T, n_embed), dtype=jnp.float32)
    wq = jax.random.normal(kq, (n_embed, head_size), dtype=jnp.float32) * 0.02
    wk = jax.random.normal(kk, (n_embed, head_size), dtype=jnp.float32) * 0.02
    wv = jax.random.normal(kv, (n_embed, head_size), dtype=jnp.float32) * 0.02

    out = head_attention(x, wq, wk, wv)
    out = jax.block_until_ready(out)

    ref = reference(x, wq, wk, wv)
    assert out.shape == (B, T, head_size)
    # bf16 matmul operands (f32 accumulation) -> loose tolerance vs f32 reference.
    assert jnp.allclose(out, ref, atol=2e-2, rtol=2e-2), "mismatch vs reference"

    print("KERNEL_OK")
</pallas_src>

<mosaic_0001>
module attributes {stable_mosaic.version = 11 : i64} {
  func.func @_head_kernel(%arg0: i32, %arg1: memref<1x16x384xf32, #tpu.memory_space<vmem>>, %arg2: memref<384x192xf32, #tpu.memory_space<vmem>>, %arg3: memref<16x16xf32, #tpu.memory_space<vmem>>, %arg4: memref<1x16x64xf32, #tpu.memory_space<vmem>>) attributes {dimension_semantics = [#tpu.dimension_semantics<parallel>], iteration_bounds = array<i64: 2>, scalar_prefetch = 0 : i64, scratch_operands = 0 : i64, tpu.core_type = #tpu.core_type<tc>, window_params = [{transform_indices = @transform_0, window_bounds = array<i64: 1, 16, 384>}, {pipeline_mode = #tpu.pipeline_mode<synchronous>, transform_indices = @transform_1, window_bounds = array<i64: 384, 192>}, {pipeline_mode = #tpu.pipeline_mode<synchronous>, transform_indices = @transform_2, window_bounds = array<i64: 16, 16>}, {transform_indices = @transform_3, window_bounds = array<i64: 1, 16, 64>}]} {
    %c0 = arith.constant 0 : index
    %c0_0 = arith.constant 0 : index
    %c0_1 = arith.constant 0 : index
    %0 = vector.load %arg1[%c0, %c0_0, %c0_1] : memref<1x16x384xf32, #tpu.memory_space<vmem>>, vector<1x16x384xf32>
    %1 = vector.shape_cast %0 : vector<1x16x384xf32> to vector<16x384xf32>
    %2 = arith.truncf %1 : vector<16x384xf32> to vector<16x384xbf16>
    %c0_2 = arith.constant 0 : index
    %c0_3 = arith.constant 0 : index
    %3 = vector.load %arg2[%c0_2, %c0_3] : memref<384x192xf32, #tpu.memory_space<vmem>>, vector<384x192xf32>
    %4 = arith.truncf %3 : vector<384x192xf32> to vector<384x192xbf16>
    %cst = arith.constant dense<0.000000e+00> : vector<16x192xf32>
    %5 = tpu.matmul %2, %4, %cst {dimension_numbers = #tpu.dot_dimension_numbers<[1], [0], [0], [1], [0, 0, 1, 1], [], []>} : vector<16x384xbf16>, vector<384x192xbf16>, vector<16x192xf32> -> vector<16x192xf32>
    %6 = vector.extract_strided_slice %5 {offsets = [0, 0], sizes = [16, 64], strides = [1, 1]} : vector<16x192xf32> to vector<16x64xf32>
    %7 = arith.truncf %6 : vector<16x64xf32> to vector<16x64xbf16>
    %8 = vector.extract_strided_slice %5 {offsets = [0, 64], sizes = [16, 64], strides = [1, 1]} : vector<16x192xf32> to vector<16x64xf32>
    %9 = arith.truncf %8 : vector<16x64xf32> to vector<16x64xbf16>
    %10 = vector.extract_strided_slice %5 {offsets = [0, 128], sizes = [16, 64], strides = [1, 1]} : vector<16x192xf32> to vector<16x64xf32>
    %11 = arith.truncf %10 : vector<16x64xf32> to vector<16x64xbf16>
    %cst_4 = arith.constant dense<0.000000e+00> : vector<16x16xf32>
    %12 = tpu.matmul %7, %9, %cst_4 {dimension_numbers = #tpu.dot_dimension_numbers<[1], [1], [0], [0], [0, 0, 1, 0], [], []>} : vector<16x64xbf16>, vector<16x64xbf16>, vector<16x16xf32> -> vector<16x16xf32>
    %c0_5 = arith.constant 0 : index
    %c0_6 = arith.constant 0 : index
    %13 = vector.load %arg3[%c0_5, %c0_6] : memref<16x16xf32, #tpu.memory_space<vmem>>, vector<16x16xf32>
    %14 = arith.addf %12, %13 : vector<16x16xf32>
    %cst_7 = arith.constant dense<0xFF800000> : vector<16xf32>
    %15 = vector.multi_reduction <maximumf>, %14, %cst_7 [1] : vector<16x16xf32> to vector<16xf32>
    %16 = vector.shape_cast %15 : vector<16xf32> to vector<16x1xf32>
    %17 = vector.broadcast %16 : vector<16x1xf32> to vector<16x16xf32>
    %18 = arith.subf %14, %17 : vector<16x16xf32>
    %19 = math.exp %18 : vector<16x16xf32>
    %cst_8 = arith.constant dense<0.000000e+00> : vector<16xf32>
    %20 = vector.multi_reduction <add>, %19, %cst_8 [1] : vector<16x16xf32> to vector<16xf32>
    %21 = vector.shape_cast %20 : vector<16xf32> to vector<16x1xf32>
    %22 = tpu.reciprocal %21 {approx = true} : vector<16x1xf32> -> vector<16x1xf32>
    %23 = vector.broadcast %22 : vector<16x1xf32> to vector<16x16xf32>
    %24 = arith.mulf %19, %23 : vector<16x16xf32>
    %25 = arith.truncf %24 : vector<16x16xf32> to vector<16x16xbf16>
    %cst_9 = arith.constant dense<0.000000e+00> : vector<16x64xf32>
    %26 = tpu.matmul %25, %11, %cst_9 {dimension_numbers = #tpu.dot_dimension_numbers<[1], [0], [0], [1], [0, 0, 1, 1], [], []>} : vector<16x16xbf16>, vector<16x64xbf16>, vector<16x64xf32> -> vector<16x64xf32>
    %c0_10 = arith.constant 0 : index
    %c0_11 = arith.constant 0 : index
    %c0_12 = arith.constant 0 : index
    %27 = vector.load %arg4[%c0_10, %c0_11, %c0_12] : memref<1x16x64xf32, #tpu.memory_space<vmem>>, vector<1x16x64xf32>
    %28 = vector.shape_cast %27 : vector<1x16x64xf32> to vector<16x64xf32>
    %29 = vector.shape_cast %26 : vector<16x64xf32> to vector<1x16x64xf32>
    tpu.vector_store %arg4[%c0_10, %c0_11, %c0_12], %29 {strides = array<i32>} : memref<1x16x64xf32, #tpu.memory_space<vmem>>, vector<1x16x64xf32>,
    return
  }
  func.func @transform_0(%arg0: i32) -> (i32, i32, i32) {
    %c0_i32 = arith.constant 0 : i32
    %c0_i32_0 = arith.constant 0 : i32
    %c0_i32_1 = arith.constant 0 : i32
    return %arg0, %c0_i32, %c0_i32_0 : i32, i32, i32
  }
  func.func @transform_1(%arg0: i32) -> (i32, i32) {
    %c0_i32 = arith.constant 0 : i32
    %c0_i32_0 = arith.constant 0 : i32
    %c0_i32_1 = arith.constant 0 : i32
    return %c0_i32, %c0_i32_0 : i32, i32
  }
  func.func @transform_2(%arg0: i32) -> (i32, i32) {
    %c0_i32 = arith.constant 0 : i32
    %c0_i32_0 = arith.constant 0 : i32
    %c0_i32_1 = arith.constant 0 : i32
    return %c0_i32, %c0_i32_0 : i32, i32
  }
  func.func @transform_3(%arg0: i32) -> (i32, i32, i32) {
    %c0_i32 = arith.constant 0 : i32
    %c0_i32_0 = arith.constant 0 : i32
    %c0_i32_1 = arith.constant 0 : i32
    return %arg0, %c0_i32, %c0_i32_0 : i32, i32, i32
  }
}

</mosaic_0001>

<llo_original>
// kernel: tpu_custom_call.1
$region0: #{tpu_custom_call.1}
  #allocation0 [shape = 'u32[]', space=smem, size = 0x4, offset = 0x4, fixed_abs, tag = 'smem constant byte address 0x4 - core index']
  #allocation1 [shape = 'u32[144,128]{1,0:T(1,128)}', space=vmem, size = 0x12000, scoped, tag = 'internal scratch']
  %s0 = inlined_call_operand.vmem [shape: f32[2,16,384], index: 0, kind: input, shape index: {}]
  %s1 = inlined_call_operand.vmem [shape: f32[384,192], index: 1, kind: input, shape index: {}]
  %s2 = inlined_call_operand.vmem [shape: f32[16,16], index: 2, kind: input, shape index: {}]
  %s3 = inlined_call_operand.hbm [shape: f32[2,16,64], index: 3, kind: output, shape index: {}]
  %s4 = sld [smem:[#allocation0]]
  $region45: #{tpu_custom_call.1} parent=0
    _
  %s6 = ssub.s32 1, %s4
  %s7 = scalar_select 0, %s6, %s4
  $region1: #{tpu_custom_call.1} parent=0
    #allocation2 [shape = 'u8[16384]{0}', space=vmem, size = 0x4000, scoped, tag = 'output window, operand 0']
    #allocation3 [shape = 's32[2]{0}', space=sflag, size = 0x8, scoped, tag = 'scoped memory for tpu_custom_call.1']
    %8 = vsyncpa [#allocation3], 0
    %s9 = scalar_lea.sflag [#allocation3], 1
    %10 = vsyncpa %s9, 0
    loop: start=0, step=1, limit=4
    $region2: #{tpu_custom_call.1} parent=1 // loop_pre_header
      _
    $region3: #{tpu_custom_call.1} parent=1 // loop_header
      %s12 = sphi 0, %s16
      %p13 = scmp.ge.s32.totalorder %s12, 4
      %s22 = sphi 0, %s24
      %s25 = sphi 0, %s22
      %s26 = sphi 0, %s25
      %s42 = sphi 0, %s26
      %s46 = sphi 0, %s46
      %s48 = sphi 0, %s46
      %s49 = sphi 0, %s48
      %s63 = sphi 0, %s49
      %s67 = sphi 0, %s67
      %s69 = sphi 0, %s67
      %s70 = sphi 0, %s69
      %s84 = sphi 0, %s70
      %s90 = sphi 0, %s92
      %s93 = sphi 0, %s90
      %s94 = sphi 0, %s93
      %s110 = sphi 0, %s94
    $region4: #{tpu_custom_call.1} parent=1 // loop_header_branch
      %15 = sbr.rel (%p13) target = $region8
    $region5: #{tpu_custom_call.1} parent=1 // loop_body
      %s17 = ssub.s32 %s12, 1
      %s18 = ssub.s32 %s12, 2
      %s19 = sadd.s32 %s12, 1
      %s20 = ssub.s32 %s12, %s19
      %p21 = scmp.eq.s32.totalorder %s20, 0
      %s23 = sadd.s32 %s22, 1
      %s24 = scalar_select %p21, %s22, %s23
      %p27 = pneg %p21
      %p28 = scmp.eq.s32.totalorder %s12, 1
      %p29 = por %p27, %p28
      %p30 = scmp.ne.s32.totalorder %s22, %s25
      %p31 = scmp.eq.s32.totalorder %s12, 0
      %p32 = por %p30, %p31
      %p33 = scmp.ne.s32.totalorder %s22, %s25
      %p34 = scmp.eq.s32.totalorder %s17, 1
      %p35 = por %p33, %p34
      %p36 = scmp.ne.s32.totalorder %s25, %s26
      %p37 = scmp.eq.s32.totalorder %s17, 0
      %p38 = por %p36, %p37
      %p39 = scmp.ne.s32.totalorder %s25, %s26
      %p40 = scmp.eq.s32.totalorder %s18, 1
      %p41 = por %p39, %p40
      %p43 = scmp.ne.s32.totalorder %s26, %s42
      %p44 = scmp.eq.s32.totalorder %s18, 0
      %p45 = por %p43, %p44
      %s47 = sadd.s32 %s46, 1
      %p50 = scmp.eq.s32.totalorder %s12, 1
      %p51 = scmp.ne.s32.totalorder %s46, %s48
      %p52 = scmp.eq.s32.totalorder %s12, 0
      %p53 = por %p51, %p52
      %p54 = scmp.ne.s32.totalorder %s46, %s48
      %p55 = scmp.eq.s32.totalorder %s17, 1
      %p56 = por %p54, %p55
      %p57 = scmp.ne.s32.totalorder %s48, %s49
      %p58 = scmp.eq.s32.totalorder %s17, 0
      %p59 = por %p57, %p58
      %p60 = scmp.ne.s32.totalorder %s48, %s49
      %p61 = scmp.eq.s32.totalorder %s18, 1
      %p62 = por %p60, %p61
      %p64 = scmp.ne.s32.totalorder %s49, %s63
      %p65 = scmp.eq.s32.totalorder %s18, 0
      %p66 = por %p64, %p65
      %s68 = sadd.s32 %s67, 1
      %p71 = scmp.eq.s32.totalorder %s12, 1
      %p72 = scmp.ne.s32.totalorder %s67, %s69
      %p73 = scmp.eq.s32.totalorder %s12, 0
      %p74 = por %p72, %p73
      %p75 = scmp.ne.s32.totalorder %s67, %s69
      %p76 = scmp.eq.s32.totalorder %s17, 1
      %p77 = por %p75, %p76
      %p78 = scmp.ne.s32.totalorder %s69, %s70
      %p79 = scmp.eq.s32.totalorder %s17, 0
      %p80 = por %p78, %p79
      %p81 = scmp.ne.s32.totalorder %s69, %s70
      %p82 = scmp.eq.s32.totalorder %s18, 1
      %p83 = por %p81, %p82
      %p85 = scmp.ne.s32.totalorder %s70, %s84
      %p86 = scmp.eq.s32.totalorder %s18, 0
      %p87 = por %p85, %p86
      %s88 = ssub.s32 %s12, %s19
      %p89 = scmp.eq.s32.totalorder %s88, 0
      %s91 = sadd.s32 %s90, 1
      %s92 = scalar_select %p89, %s90, %s91
      %p95 = pneg %p89
      %p96 = scmp.eq.s32.totalorder %s12, 1
      %p97 = por %p95, %p96
      %p98 = scmp.ne.s32.totalorder %s90, %s93
      %p99 = scmp.eq.s32.totalorder %s12, 0
      %p100 = por %p98, %p99
      %p101 = scmp.ne.s32.totalorder %s90, %s93
      %p102 = scmp.eq.s32.totalorder %s17, 1
      %p103 = por %p101, %p102
      %p104 = scmp.ne.s32.totalorder %s93, %s94
      %p105 = scmp.eq.s32.totalorder %s17, 0
      %p106 = por %p104, %p105
      %p107 = scmp.ne.s32.totalorder %s93, %s94
      %p108 = scmp.eq.s32.totalorder %s18, 1
      %p109 = por %p107, %p108
      %p111 = scmp.ne.s32.totalorder %s94, %s110
      %p112 = scmp.eq.s32.totalorder %s18, 0
      %p113 = por %p111, %p112
      %p114 = scmp.le.s32.totalorder 1, %s12
      %p115 = scmp.lt.s32.totalorder %s12, 3
      %p116 = pnand %p114, %p115
      %p117 = pneg %p116
      // Predicated region
      $region9: #{tpu_custom_call.1} parent=5 // pred_check
        _
      $region10: #{tpu_custom_call.1} parent=5 // pred_check_branch
        %119 = sbr.rel (%p116) target = $region12
      $region11: #{tpu_custom_call.1} parent=5 // pred_region
        %s120 = ssub.s32 %s12, 1
        // Predicated region
        $region13: #{tpu_custom_call.1} parent=11 // pred_check
          %p121 = pneg %p59
        $region14: #{tpu_custom_call.1} parent=11 // pred_check_branch
          %123 = sbr.rel (%p121) target = $region16
        $region15: #{tpu_custom_call.1} parent=11 // pred_region
          _
        $region16: #{tpu_custom_call.1} parent=11 // pred_fallthru
          _
        // Predicated region
        $region17: #{tpu_custom_call.1} parent=11 // pred_check
          %p124 = pneg %p80
        $region18: #{tpu_custom_call.1} parent=11 // pred_check_branch
          %126 = sbr.rel (%p124) target = $region20
        $region19: #{tpu_custom_call.1} parent=11 // pred_region
          _
        $region20: #{tpu_custom_call.1} parent=11 // pred_fallthru
          _
      $region12: #{tpu_custom_call.1} parent=5 // pred_fallthru
        _
      %p127 = scmp.lt.s32.totalorder %s12, 2
      // Predicated region
      $region21: #{tpu_custom_call.1} parent=5 // pred_check
        %p128 = pneg %p127
      $region22: #{tpu_custom_call.1} parent=5 // pred_check_branch
        %130 = sbr.rel (%p128) target = $region24
      $region23: #{tpu_custom_call.1} parent=5 // pred_region
        // Predicated region
        $region25: #{tpu_custom_call.1} parent=23 // pred_check
          %p131 = pneg %p32
        $region26: #{tpu_custom_call.1} parent=23 // pred_check_branch
          %133 = sbr.rel (%p131) target = $region28
        $region27: #{tpu_custom_call.1} parent=23 // pred_region
          %p134 = scmp.lt.s32.totalorder %s12, 1
          %s135 = scalar_select %p134, %s12, 1
          %s136 = smul.addr %s135, 6
          %s137 = smul.addr %s136, 8
          %s138 = scalar_lea.vmem %s0, %s137
        $region28: #{tpu_custom_call.1} parent=23 // pred_fallthru
          _
      $region24: #{tpu_custom_call.1} parent=5 // pred_fallthru
        _
      %p139 = scmp.le.s32.totalorder 1, %s12
      %p140 = scmp.lt.s32.totalorder %s12, 3
      %p141 = pnand %p139, %p140
      %p142 = pneg %p141
      // Predicated region
      $region29: #{tpu_custom_call.1} parent=5 // pred_check
        _
      $region30: #{tpu_custom_call.1} parent=5 // pred_check_branch
        %144 = sbr.rel (%p141) target = $region32
      $region31: #{tpu_custom_call.1} parent=5 // pred_region
        %s145 = ssub.s32 %s12, 1
        %p146 = scmp.lt.s32.totalorder %s17, 1
        %s147 = scalar_select %p146, %s17, 1
        %s148 = smul.addr %s147, 6
        %s149 = smul.addr %s148, 8
        %s150 = scalar_lea.vmem %s0, %s149
        %p151 = pneg %p38
        %p152 = pneg %p35
        %p153 = pneg %p59
        %p154 = pneg %p56
        %p155 = pneg %p80
        %p156 = pneg %p77
        %p157 = pneg %p106
        %p158 = pneg %p103
        %s159 = sand.u32 %s93, 1
        %s160 = scalar_lea.sflag [#allocation3], %s159
        %s161 = sand.u32 %s93, 1
        %s162 = smul.addr %s161, 16
        %s163 = scalar_lea.vmem [#allocation2], %s162
        %p164 = scmp.lt.s32.totalorder %s17, 1
        %s165 = scalar_select %p164, %s17, 1
        %s166 = smul.addr %s165, 6
        %s167 = smul.addr %s166, 8
        %s168 = scalar_lea.vmem %s0, %s167
        %v170 = vld [vmem:[%s168] sm:$0xff]
        %v171 = vld [vmem:[%s168 + $0x8] sm:$0xff]
        %v172 = vld [vmem:[%s168 + $0x10] sm:$0xff]
        %v173 = vld [vmem:[%s168 + $0x18] sm:$0xff]
        %v174 = vld [vmem:[%s168 + $0x20] sm:$0xff]
        %v175 = vld [vmem:[%s168 + $0x28] sm:$0xff]
        %v176 = vpack.c.bf16 %v173, %v170
        %v177 = vpack.c.bf16 %v174, %v171
        %v178 = vpack.c.bf16 %v175, %v172
        %v179 = vld [vmem:[%s1] sm:$0xff]
        %v180 = vld [vmem:[%s1 + $0x8] sm:$0xff]
        %v181 = vld [vmem:[%s1 + $0x10] sm:$0xff]
        %v182 = vld [vmem:[%s1 + $0x18] sm:$0xff]
        %v183 = vld [vmem:[%s1 + $0x20] sm:$0xff]
        %v184 = vld [vmem:[%s1 + $0x28] sm:$0xff]
        %v185 = vld [vmem:[%s1 + $0x30] sm:$0xff]
        %v186 = vld [vmem:[%s1 + $0x38] sm:$0xff]
        %v187 = vld [vmem:[%s1 + $0x40] sm:$0xff]
        %v188 = vld [vmem:[%s1 + $0x48] sm:$0xff]
        %v189 = vld [vmem:[%s1 + $0x50] sm:$0xff]
        %v190 = vld [vmem:[%s1 + $0x58] sm:$0xff]
        %v191 = vld [vmem:[%s1 + $0x60] sm:$0xff]
        %v192 = vld [vmem:[%s1 + $0x68] sm:$0xff]
        %v193 = vld [vmem:[%s1 + $0x70] sm:$0xff]
        %v194 = vld [vmem:[%s1 + $0x78] sm:$0xff]
        %v195 = vld [vmem:[%s1 + $0x80] sm:$0xff]
        %v196 = vld [vmem:[%s1 + $0x88] sm:$0xff]
        %v197 = vld [vmem:[%s1 + $0x90] sm:$0xff]
        %v198 = vld [vmem:[%s1 + $0x98] sm:$0xff]
        %v199 = vld [vmem:[%s1 + $0xa0] sm:$0xff]
        %v200 = vld [vmem:[%s1 + $0xa8] sm:$0xff]
        %v201 = vld [vmem:[%s1 + $0xb0] sm:$0xff]
        %v202 = vld [vmem:[%s1 + $0xb8] sm:$0xff]
        %v203 = vld [vmem:[%s1 + $0xc0] sm:$0xff]
        %v204 = vld [vmem:[%s1 + $0xc8] sm:$0xff]
        %v205 = vld [vmem:[%s1 + $0xd0] sm:$0xff]
        %v206 = vld [vmem:[%s1 + $0xd8] sm:$0xff]
        %v207 = vld [vmem:[%s1 + $0xe0] sm:$0xff]
        %v208 = vld [vmem:[%s1 + $0xe8] sm:$0xff]
        %v209 = vld [vmem:[%s1 + $0xf0] sm:$0xff]
        %v210 = vld [vmem:[%s1 + $0xf8] sm:$0xff]
        %v211 = vld [vmem:[%s1 + $0x100] sm:$0xff]
        %v212 = vld [vmem:[%s1 + $0x108] sm:$0xff]
        %v213 = vld [vmem:[%s1 + $0x110] sm:$0xff]
        %v214 = vld [vmem:[%s1 + $0x118] sm:$0xff]
        %v215 = vld [vmem:[%s1 + $0x120] sm:$0xff]
        %v216 = vld [vmem:[%s1 + $0x128] sm:$0xff]
        %v217 = vld [vmem:[%s1 + $0x130] sm:$0xff]
        %v218 = vld [vmem:[%s1 + $0x138] sm:$0xff]
        %v219 = vld [vmem:[%s1 + $0x140] sm:$0xff]
        %v220 = vld [vmem:[%s1 + $0x148] sm:$0xff]
        %v221 = vld [vmem:[%s1 + $0x150] sm:$0xff]
        %v222 = vld [vmem:[%s1 + $0x158] sm:$0xff]
        %v223 = vld [vmem:[%s1 + $0x160] sm:$0xff]
        %v224 = vld [vmem:[%s1 + $0x168] sm:$0xff]
        %v225 = vld [vmem:[%s1 + $0x170] sm:$0xff]
        %v226 = vld [vmem:[%s1 + $0x178] sm:$0xff]
        %v227 = vld [vmem:[%s1 + $0x180] sm:$0xff]
        %v228 = vld [vmem:[%s1 + $0x188] sm:$0xff]
        %v229 = vld [vmem:[%s1 + $0x190] sm:$0xff]
        %v230 = vld [vmem:[%s1 + $0x198] sm:$0xff]
        %v231 = vld [vmem:[%s1 + $0x1a0] sm:$0xff]
        %v232 = vld [vmem:[%s1 + $0x1a8] sm:$0xff]
        %v233 = vld [vmem:[%s1 + $0x1b0] sm:$0xff]
        %v234 = vld [vmem:[%s1 + $0x1b8] sm:$0xff]
        %v235 = vld [vmem:[%s1 + $0x1c0] sm:$0xff]
        %v236 = vld [vmem:[%s1 + $0x1c8] sm:$0xff]
        %v237 = vld [vmem:[%s1 + $0x1d0] sm:$0xff]
        %v238 = vld [vmem:[%s1 + $0x1d8] sm:$0xff]
        %v239 = vld [vmem:[%s1 + $0x1e0] sm:$0xff]
        %v240 = vld [vmem:[%s1 + $0x1e8] sm:$0xff]
        %v241 = vld [vmem:[%s1 + $0x1f0] sm:$0xff]
        %v242 = vld [vmem:[%s1 + $0x1f8] sm:$0xff]
        %v243 = vld [vmem:[%s1 + $0x200] sm:$0xff]
        %v244 = vld [vmem:[%s1 + $0x208] sm:$0xff]
        %v245 = vld [vmem:[%s1 + $0x210] sm:$0xff]
        %v246 = vld [vmem:[%s1 + $0x218] sm:$0xff]
        %v247 = vld [vmem:[%s1 + $0x220] sm:$0xff]
        %v248 = vld [vmem:[%s1 + $0x228] sm:$0xff]
        %v249 = vld [vmem:[%s1 + $0x230] sm:$0xff]
        %v250 = vld [vmem:[%s1 + $0x238] sm:$0xff]
        %v251 = vld [vmem:[%s1 + $0x240] sm:$0xff]
        %v252 = vld [vmem:[%s1 + $0x248] sm:$0xff]
        %v253 = vld [vmem:[%s1 + $0x250] sm:$0xff]
        %v254 = vld [vmem:[%s1 + $0x258] sm:$0xff]
        %v255 = vld [vmem:[%s1 + $0x260] sm:$0xff]
        %v256 = vld [vmem:[%s1 + $0x268] sm:$0xff]
        %v257 = vld [vmem:[%s1 + $0x270] sm:$0xff]
        %v258 = vld [vmem:[%s1 + $0x278] sm:$0xff]
        %v259 = vld [vmem:[%s1 + $0x280] sm:$0xff]
        %v260 = vld [vmem:[%s1 + $0x288] sm:$0xff]
        %v261 = vld [vmem:[%s1 + $0x290] sm:$0xff]
        %v262 = vld [vmem:[%s1 + $0x298] sm:$0xff]
        %v263 = vld [vmem:[%s1 + $0x2a0] sm:$0xff]
        %v264 = vld [vmem:[%s1 + $0x2a8] sm:$0xff]
        %v265 = vld [vmem:[%s1 + $0x2b0] sm:$0xff]
        %v266 = vld [vmem:[%s1 + $0x2b8] sm:$0xff]
        %v267 = vld [vmem:[%s1 + $0x2c0] sm:$0xff]
        %v268 = vld [vmem:[%s1 + $0x2c8] sm:$0xff]
        %v269 = vld [vmem:[%s1 + $0x2d0] sm:$0xff]
        %v270 = vld [vmem:[%s1 + $0x2d8] sm:$0xff]
        %v271 = vld [vmem:[%s1 + $0x2e0] sm:$0xff]
        %v272 = vld [vmem:[%s1 + $0x2e8] sm:$0xff]
        %v273 = vld [vmem:[%s1 + $0x2f0] sm:$0xff]
        %v274 = vld [vmem:[%s1 + $0x2f8] sm:$0xff]
        %v275 = vpack.c.bf16 %v181, %v179
        %v276 = vpack.c.bf16 %v182, %v180
        %v277 = vpack.c.bf16 %v185, %v183
        %v278 = vpack.c.bf16 %v186, %v184
        %v279 = vpack.c.bf16 %v189, %v187
        %v280 = vpack.c.bf16 %v190, %v188
        %v281 = vpack.c.bf16 %v193, %v191
        %v282 = vpack.c.bf16 %v194, %v192
        %v283 = vpack.c.bf16 %v197, %v195
        %v284 = vpack.c.bf16 %v198, %v196
        %v285 = vpack.c.bf16 %v201, %v199
        %v286 = vpack.c.bf16 %v202, %v200
        %v287 = vpack.c.bf16 %v205, %v203
        %v288 = vpack.c.bf16 %v206, %v204
        %v289 = vpack.c.bf16 %v209, %v207
        %v290 = vpack.c.bf16 %v210, %v208
        %v291 = vpack.c.bf16 %v213, %v211
        %v292 = vpack.c.bf16 %v214, %v212
        %v293 = vpack.c.bf16 %v217, %v215
        %v294 = vpack.c.bf16 %v218, %v216
        %v295 = vpack.c.bf16 %v221, %v219
        %v296 = vpack.c.bf16 %v222, %v220
        %v297 = vpack.c.bf16 %v225, %v223
        %v298 = vpack.c.bf16 %v226, %v224
        %v299 = vpack.c.bf16 %v229, %v227
        %v300 = vpack.c.bf16 %v230, %v228
        %v301 = vpack.c.bf16 %v233, %v231
        %v302 = vpack.c.bf16 %v234, %v232
        %v303 = vpack.c.bf16 %v237, %v235
        %v304 = vpack.c.bf16 %v238, %v236
        %v305 = vpack.c.bf16 %v241, %v239
        %v306 = vpack.c.bf16 %v242, %v240
        %v307 = vpack.c.bf16 %v245, %v243
        %v308 = vpack.c.bf16 %v246, %v244
        %v309 = vpack.c.bf16 %v249, %v247
        %v310 = vpack.c.bf16 %v250, %v248
        %v311 = vpack.c.bf16 %v253, %v251
        %v312 = vpack.c.bf16 %v254, %v252
        %v313 = vpack.c.bf16 %v257, %v255
        %v314 = vpack.c.bf16 %v258, %v256
        %v315 = vpack.c.bf16 %v261, %v259
        %v316 = vpack.c.bf16 %v262, %v260
        %v317 = vpack.c.bf16 %v265, %v263
        %v318 = vpack.c.bf16 %v266, %v264
        %v319 = vpack.c.bf16 %v269, %v267
        %v320 = vpack.c.bf16 %v270, %v268
        %v321 = vpack.c.bf16 %v273, %v271
        %v322 = vpack.c.bf16 %v274, %v272
        %323 = vmatprep.subr.bf16.mxu0 %v276
        %324 = vmatpush1.bf16.msra.mxu0 %v275
        %325 = vmatprep.subr.bf16.mxu0 %v278
        %326 = vmatpush1.bf16.msra.mxu0 %v277
        %327 = vmatprep.subr.bf16.mxu0 %v280
        %328 = vmatpush1.bf16.msra.mxu0 %v279
        %329 = vmatprep.subr.bf16.mxu0 %v282
        %330 = vmatpush1.bf16.msra.mxu0 %v281
        %331 = vmatprep.subr.bf16.mxu0 %v284
        %332 = vmatpush1.bf16.msra.mxu0 %v283
        %333 = vmatprep.subr.bf16.mxu0 %v286
        %334 = vmatpush1.bf16.msra.mxu0 %v285
        %335 = vmatprep.subr.bf16.mxu0 %v288
        %336 = vmatpush1.bf16.msra.mxu0 %v287
        %337 = vmatprep.subr.bf16.mxu0 %v290
        %338 = vmatpush1.bf16.msra.mxu0 %v289
        %339 = vmatprep.subr.bf16.mxu0 %v292
        %340 = vmatpush1.bf16.msra.mxu0 %v291
        %341 = vmatprep.subr.bf16.mxu0 %v294
        %342 = vmatpush1.bf16.msra.mxu0 %v293
        %343 = vmatprep.subr.bf16.mxu0 %v296
        %344 = vmatpush1.bf16.msra.mxu0 %v295
        %345 = vmatprep.subr.bf16.mxu0 %v298
        %346 = vmatpush1.bf16.msra.mxu0 %v297
        %347 = vmatprep.subr.bf16.mxu0 %v300
        %348 = vmatpush1.bf16.msra.mxu0 %v299
        %349 = vmatprep.subr.bf16.mxu0 %v302
        %350 = vmatpush1.bf16.msra.mxu0 %v301
        %351 = vmatprep.subr.bf16.mxu0 %v304
        %352 = vmatpush1.bf16.msra.mxu0 %v303
        %353 = vmatprep.subr.bf16.mxu0 %v306
        %354 = vmatpush1.bf16.msra.mxu0 %v305
        %355 = vmatprep.mubr.bf16.mxu0 %v177
        %356 = vmatmul.mubr.bf16.gmra.mrb[0].mxu0 %v176
        %v357 = vpop.f32.mrb[0].mxu0
        %v358 = vadd.f32 0.0, %v357
        %v359 = vpop.f32.mrb[0].mxu0
        %v360 = vadd.f32 0.0, %v359
        %v361 = vpop.f32.mrb[0].mxu0
        %v362 = vadd.f32 0.0, %v361
        %v363 = vpop.f32.mrb[0].mxu0
        %v364 = vadd.f32 0.0, %v363
        %365 = vdwg.mxu0
        %366 = vmatprep.subr.bf16.mxu0 %v308
        %367 = vmatpush1.bf16.msra.mxu0 %v307
        %368 = vmatprep.subr.bf16.mxu0 %v310
        %369 = vmatpush1.bf16.msra.mxu0 %v309
        %370 = vmatprep.subr.bf16.mxu0 %v312
        %371 = vmatpush1.bf16.msra.mxu0 %v311
        %372 = vmatprep.subr.bf16.mxu0 %v314
        %373 = vmatpush1.bf16.msra.mxu0 %v313
        %374 = vmatprep.subr.bf16.mxu0 %v316
        %375 = vmatpush1.bf16.msra.mxu0 %v315
        %376 = vmatprep.subr.bf16.mxu0 %v318
        %377 = vmatpush1.bf16.msra.mxu0 %v317
        %378 = vmatprep.subr.bf16.mxu0 %v320
        %379 = vmatpush1.bf16.msra.mxu0 %v319
        %380 = vmatprep.subr.bf16.mxu0 %v322
        %381 = vmatpush1.bf16.msra.mxu0 %v321
        %382 = vmatprep.subr.bf16.mxu0 0
        %383 = vmatpush1.bf16.msra.mxu0 0
        %384 = vmatprep.subr.bf16.mxu0 0
        %385 = vmatpush1.bf16.msra.mxu0 0
        %386 = vmatprep.subr.bf16.mxu0 0
        %387 = vmatpush1.bf16.msra.mxu0 0
        %388 = vmatprep.subr.bf16.mxu0 0
        %389 = vmatpush1.bf16.msra.mxu0 0
        %390 = vmatprep.subr.bf16.mxu0 0
        %391 = vmatpush1.bf16.msra.mxu0 0
        %392 = vmatprep.subr.bf16.mxu0 0
        %393 = vmatpush1.bf16.msra.mxu0 0
        %394 = vmatprep.subr.bf16.mxu0 0
        %395 = vmatpush1.bf16.msra.mxu0 0
        %396 = vmatprep.subr.bf16.mxu0 0
        %397 = vmatpush1.bf16.msra.mxu0 0
        %398 = vmatprep.mubr.bf16.mxu0 0
        %399 = vmatmul.mubr.bf16.gmra.mrb[0].mxu0 %v178
        %v400 = vpop.f32.mrb[0].mxu0
        %v401 = vadd.f32 %v358, %v400
        %v402 = vpop.f32.mrb[0].mxu0
        %v403 = vadd.f32 %v360, %v402
        %v404 = vpop.f32.mrb[0].mxu0
        %v405 = vadd.f32 %v362, %v404
        %v406 = vpop.f32.mrb[0].mxu0
        %v407 = vadd.f32 %v364, %v406
        %408 = vdwg.mxu0
        %v409 = vpack.c.bf16 %v405, %v401
        %v410 = vpack.c.bf16 %v407, %v403
        %v411 = vld [vmem:[%s2] sm:$0xff]
        %v412 = vld [vmem:[%s2 + $0x8] sm:$0xff]
        %414 = vrot.lane.b32.xlu0 %v409, 64
        %v415 = vpop.permute.xlu0 %414
        %vm416 = vcmask 523264
        %v418 = vsel %vm416, %v409, 0
        %v421 = vsel %vm416, %v415, 0
        %423 = vmatprep.subr.bf16.mxu0 0
        %424 = vmatpush1.bf16.xpose.msra.mxu0 %v421
        %425 = vmatprep.subr.bf16.mxu0 0
        %426 = vmatpush1.bf16.xpose.msra.mxu0 0
        %427 = vmatprep.subr.bf16.mxu0 0
        %428 = vmatpush1.bf16.xpose.msra.mxu0 0
        %429 = vmatprep.subr.bf16.mxu0 0
        %430 = vmatpush1.bf16.xpose.msra.mxu0 0
        %431 = vmatprep.subr.bf16.mxu0 0
        %432 = vmatpush1.bf16.xpose.msra.mxu0 0
        %433 = vmatprep.subr.bf16.mxu0 0
        %434 = vmatpush1.bf16.xpose.msra.mxu0 0
        %435 = vmatprep.subr.bf16.mxu0 0
        %436 = vmatpush1.bf16.xpose.msra.mxu0 0
        %437 = vmatprep.subr.bf16.mxu0 0
        %438 = vmatpush1.bf16.xpose.msra.mxu0 0
        %439 = vmatprep.subr.bf16.mxu0 0
        %440 = vmatpush1.bf16.xpose.msra.mxu0 0
        %441 = vmatprep.subr.bf16.mxu0 0
        %442 = vmatpush1.bf16.xpose.msra.mxu0 0
        %443 = vmatprep.subr.bf16.mxu0 0
        %444 = vmatpush1.bf16.xpose.msra.mxu0 0
        %445 = vmatprep.subr.bf16.mxu0 0
        %446 = vmatpush1.bf16.xpose.msra.mxu0 0
        %447 = vmatprep.subr.bf16.mxu0 0
        %448 = vmatpush1.bf16.xpose.msra.mxu0 0
        %449 = vmatprep.subr.bf16.mxu0 0
        %450 = vmatpush1.bf16.xpose.msra.mxu0 0
        %451 = vmatprep.subr.bf16.mxu0 0
        %452 = vmatpush1.bf16.xpose.msra.mxu0 0
        %453 = vmatprep.subr.bf16.mxu0 0
        %454 = vmatpush1.bf16.xpose.msra.mxu0 0
        %455 = vmatprep.mubr.bf16.mxu0 0
        %456 = vmatmul.mubr.bf16.gmra.mrb[0].mxu0 %v418
        %v457 = vpop.f32.mrb[0].mxu0
        %v458 = vadd.f32 %v411, %v457
        %v459 = vpop.f32.mrb[0].mxu0
        %v460 = vpop.f32.mrb[0].mxu0
        %v461 = vadd.f32 %v412, %v460
        %v462 = vpop.f32.mrb[0].mxu0
        %463 = vdwg.mxu0
        %vm464 = vcmask 130048
        %v465 = vsel %vm464, %v458, -inf
        %466 = vmax.xlane.f32.xlu0 %v465
        %v467 = vpop.xlane.xlu0 %466
        %v468 = vsel %vm464, %v461, -inf
        %469 = vmax.xlane.f32.xlu0 %v468
        %v470 = vpop.xlane.xlu0 %469
        %v471 = vsub.f32 %v458, %v467
        %v472 = vsub.f32 %v461, %v470
        %v473 = vmul.f32 %v471, 1.442695
        %v474 = vpow.pop %v473
        %v475 = vmul.f32 %v472, 1.442695
        %v476 = vpow.pop %v475
        %v477 = vsel %vm464, %v474, 0.0
        %478 = vadd.xlane.f32.xlu0 %v477
        %v479 = vpop.xlane.xlu0 %478
        %v480 = vsel %vm464, %v476, 0.0
        %481 = vadd.xlane.f32.xlu0 %v480
        %v482 = vpop.xlane.xlu0 %481
        %v483 = vrcp.pop %v479
        %v484 = vrcp.pop %v482
        %v485 = vmul.f32 %v474, %v483
        %v486 = vmul.f32 %v476, %v484
        %v487 = vpack.c.bf16 %v486, %v485
        %v489 = vsel %vm464, %v487, 0
        %491 = vmatprep.subr.bf16.mxu0 0
        %492 = vmatpush1.bf16.msra.mxu0 %v410
        %493 = vmatprep.subr.bf16.mxu0 0
        %494 = vmatpush1.bf16.msra.mxu0 0
        %495 = vmatprep.subr.bf16.mxu0 0
        %496 = vmatpush1.bf16.msra.mxu0 0
        %497 = vmatprep.subr.bf16.mxu0 0
        %498 = vmatpush1.bf16.msra.mxu0 0
        %499 = vmatprep.subr.bf16.mxu0 0
        %500 = vmatpush1.bf16.msra.mxu0 0
        %501 = vmatprep.subr.bf16.mxu0 0
        %502 = vmatpush1.bf16.msra.mxu0 0
        %503 = vmatprep.subr.bf16.mxu0 0
        %504 = vmatpush1.bf16.msra.mxu0 0
        %505 = vmatprep.subr.bf16.mxu0 0
        %506 = vmatpush1.bf16.msra.mxu0 0
        %507 = vmatprep.subr.bf16.mxu0 0
        %508 = vmatpush1.bf16.msra.mxu0 0
        %509 = vmatprep.subr.bf16.mxu0 0
        %510 = vmatpush1.bf16.msra.mxu0 0
        %511 = vmatprep.subr.bf16.mxu0 0
        %512 = vmatpush1.bf16.msra.mxu0 0
        %513 = vmatprep.subr.bf16.mxu0 0
        %514 = vmatpush1.bf16.msra.mxu0 0
        %515 = vmatprep.subr.bf16.mxu0 0
        %516 = vmatpush1.bf16.msra.mxu0 0
        %517 = vmatprep.subr.bf16.mxu0 0
        %518 = vmatpush1.bf16.msra.mxu0 0
        %519 = vmatprep.subr.bf16.mxu0 0
        %520 = vmatpush1.bf16.msra.mxu0 0
        %521 = vmatprep.subr.bf16.mxu0 0
        %522 = vmatpush1.bf16.msra.mxu0 0
        %523 = vmatprep.mubr.bf16.mxu0 0
        %524 = vmatmul.mubr.bf16.gmra.mrb[0].mxu0 %v489
        %v525 = vpop.f32.mrb[0].mxu0
        %v526 = vadd.f32 0.0, %v525
        %v527 = vpop.f32.mrb[0].mxu0
        %v528 = vpop.f32.mrb[0].mxu0
        %v529 = vadd.f32 0.0, %v528
        %v530 = vpop.f32.mrb[0].mxu0
        %531 = vdwg.mxu0
        %532 = vst.msk [vmem:[%s163] sm:$0xff] %vm416, %v526
        %533 = vst.msk [vmem:[%s163 + $0x8] sm:$0xff] %vm416, %v529
        %s534 = sand.u32 %s93, 1
        %s535 = scalar_lea.sflag [#allocation3], %s534
        %s536 = sand.u32 %s93, 1
        %s537 = smul.addr %s536, 16
        %s538 = scalar_lea.vmem [#allocation2], %s537
        // Predicated region
        $region33: #{tpu_custom_call.1} parent=31 // pred_check
          %p539 = pneg %p103
        $region34: #{tpu_custom_call.1} parent=31 // pred_check_branch
          %541 = sbr.rel (%p539) target = $region36
        $region35: #{tpu_custom_call.1} parent=31 // pred_region
          %s543 = ssub.s32 256, 256
          %544 = vsyncadd %s535, %s543
          %s545 = smul.addr %s17, 2
          %s546 = smul.addr %s545, 128
          %s547 = scalar_lea.hbm %s3, %s546
          %s548 = sshll.u32 %s538, 4
          %s549 = int_to_ptr.vmem [resolvable:$true] %s548
          %554 = dma.vmem_to_hbm [thread:$0]  %s549, 256, %s547, %s535, 128, 128, 8
        $region36: #{tpu_custom_call.1} parent=31 // pred_fallthru
          _
      $region32: #{tpu_custom_call.1} parent=5 // pred_fallthru
        _
      %p555 = scmp.le.s32.totalorder 2, %s12
      // Predicated region
      $region37: #{tpu_custom_call.1} parent=5 // pred_check
        %p556 = pneg %p555
      $region38: #{tpu_custom_call.1} parent=5 // pred_check_branch
        %558 = sbr.rel (%p556) target = $region40
      $region39: #{tpu_custom_call.1} parent=5 // pred_region
        %s559 = ssub.s32 %s12, 2
        // Predicated region
        $region41: #{tpu_custom_call.1} parent=39 // pred_check
          %p560 = pneg %p109
        $region42: #{tpu_custom_call.1} parent=39 // pred_check_branch
          %562 = sbr.rel (%p560) target = $region44
        $region43: #{tpu_custom_call.1} parent=39 // pred_region
          %s563 = sand.u32 %s94, 1
          %s564 = scalar_lea.sflag [#allocation3], %s563
          %s565 = sand.u32 %s94, 1
          %s566 = smul.addr %s565, 16
          %s567 = scalar_lea.vmem [#allocation2], %s566
          %568 = dma.done %s564, 256
        $region44: #{tpu_custom_call.1} parent=39 // pred_fallthru
          _
      $region40: #{tpu_custom_call.1} parent=5 // pred_fallthru
        _
    $region6: #{tpu_custom_call.1} parent=1 // loop_footer
      %s16 = sadd.s32 1, %s12
    $region7: #{tpu_custom_call.1} parent=1 // loop_footer_branch
      %11 = sbr.rel target = $region3
    $region8: #{tpu_custom_call.1} parent=1 // loop_exit
      _
    %569 = vsyncpa [#allocation3], 1
    %s570 = scalar_lea.sflag [#allocation3], 1
    %571 = vsyncpa %s570, 1

</llo_original>
